<compile_context>
chip_gen: v7x
topology: tpu7x:2x2x1
jax: 0.10.0
libtpu: 0.0.40
codegen_flags: <defaults>
</compile_context>

<pallas_src>
import functools

import jax
import jax.numpy as jnp
from jax.experimental import pallas as pl
from jax.experimental.pallas import tpu as pltpu

# Index conventions (Sparse4D 2D box encoding)
X_2D, Y_2D = 0, 1
CNS_2D = 0

# Loss-config "parameters" (deterministic, from typical Sparse4D configs)
BOX_LOSS_WEIGHT = 0.25   # L1Loss(loss_weight=0.25)
CNS_LOSS_WEIGHT = 1.0    # CrossEntropyLoss(use_sigmoid=True, loss_weight=1.0)

_LANE = 128
_TM_MAX = 32768          # lane-axis tile width per grid step (mem-bound; amortizes step overhead)


def _round_up(x, m):
    return ((x + m - 1) // m) * m


def _sparse_box2d_loss_kernel(M, TM, half, has_weight,
                              slab_ref, out_box_ref, out_cns_ref,
                              acc_box, acc_cns):
    """Accumulates lane-dense partial sums; finalizes per core-split slice."""
    c = pl.program_id(0)      # core-split index ("parallel")
    i = pl.program_id(1)      # tile index within this core's range ("arbitrary")

    @pl.when(i == 0)
    def _init():
        acc_box[...] = jnp.zeros_like(acc_box)
        acc_cns[...] = jnp.zeros_like(acc_cns)

    slab = slab_ref[...].astype(jnp.float32)           # (R, TM)
    box = slab[0:4, :]                                 # (4, TM)
    tgt = slab[4:8, :]                                 # (4, TM)

    # Logical column indices of this tile (independent of any index-map clamping):
    # out-of-range / padded columns get valid == False and contribute exactly 0.
    tile = c * half + i
    col = tile * TM + jax.lax.broadcasted_iota(jnp.int32, (1, TM), 1)
    valid = col < M                                    # (1, TM) bool

    # --- weighted L1 box loss partial sum (sublane-reduced accumulator) ---
    diff = jnp.abs(box - tgt)                          # (4, TM)
    if has_weight:
        l1 = diff * slab[8:12, :]
        logits = slab[12:13, :]
    else:
        l1 = diff
        logits = slab[8:9, :]
    acc_box[...] += jnp.where(valid, jnp.sum(l1, axis=0, keepdims=True), 0.0)

    # --- centerness BCE-with-logits partial sum (no cross-lane reduce needed) ---
    dx = box[X_2D:X_2D + 1, :] - tgt[X_2D:X_2D + 1, :]
    dy = box[Y_2D:Y_2D + 1, :] - tgt[Y_2D:Y_2D + 1, :]
    cns_t = jnp.exp(-jnp.sqrt(dx * dx + dy * dy))
    bce = (jnp.maximum(logits, 0.0)
           - logits * cns_t
           + jnp.log1p(jnp.exp(-jnp.abs(logits))))
    acc_cns[...] += jnp.where(valid, bce, 0.0)

    @pl.when(i == pl.num_programs(1) - 1)
    def _finalize():
        out_box_ref[0, 0] = jnp.sum(acc_box[...])
        out_cns_ref[0, 0] = jnp.sum(acc_cns[...])


def sparse_box2d_loss(box, box_target, weight=None, avg_factor=None,
                      suffix='', quality=None, tm_max=_TM_MAX):
    """JAX wrapper mirroring SparseBox2DLoss.forward (quality must be given)."""
    B, N, D = box.shape
    M = B * N
    assert D == 4
    assert quality is not None  # TODO(synk): quality=None path (box loss only) not implemented

    has_weight = weight is not None

    # One fused transpose/concat into a single lane-dense slab:
    #   rows 0-3: box, rows 4-7: target, [rows 8-11: weight], last row: CNS logits.
    rows = [box.reshape(M, D).T, box_target.reshape(M, D).T]
    if has_weight:
        rows.append(weight.reshape(M, D).T)
    rows.append(quality[..., CNS_2D].reshape(1, M))    # only the used quality channel
    slab = jnp.concatenate(rows, axis=0)               # (R, M)
    R = slab.shape[0]

    # Pad columns only to a 128-lane multiple (at most 127 cols); tail masked in-kernel.
    M_pad = _round_up(M, _LANE)
    if M_pad != M:
        slab = jnp.pad(slab, ((0, 0), (0, M_pad - M)))

    TM = _round_up(min(tm_max, M_pad), _LANE)
    n_tiles = pl.cdiv(M_pad, TM)
    n_cores = 2 if n_tiles >= 2 else 1                 # v7x: split across the 2 TensorCores
    half = pl.cdiv(n_tiles, n_cores)
    grid = (n_cores, half)

    def slab_map(c, i):
        # Clamp so any over-hanging tile of core 1 stays in-bounds; its columns
        # fail the in-kernel `valid` mask and contribute exactly zero.
        return (0, jnp.minimum(c * half + i, n_tiles - 1))

    smem_out = pl.BlockSpec((1, 1), lambda c, i: (c, 0),
                            memory_space=pltpu.MemorySpace.SMEM)

    itemsize = jnp.dtype(slab.dtype).itemsize
    cost = pl.CostEstimate(flops=25 * M,
                           transcendentals=4 * M,
                           bytes_accessed=R * M * itemsize + 8 * n_cores)

    kernel = functools.partial(_sparse_box2d_loss_kernel, M, TM, half, has_weight)

    part_box, part_cns = pl.pallas_call(
        kernel,
        out_shape=(jax.ShapeDtypeStruct((n_cores, 1), jnp.float32),
                   jax.ShapeDtypeStruct((n_cores, 1), jnp.float32)),
        grid=grid,
        in_specs=[pl.BlockSpec((R, TM), slab_map)],
        out_specs=(smem_out, smem_out),
        scratch_shapes=[pltpu.VMEM((1, TM), jnp.float32),   # acc_box (sublane-reduced)
                        pltpu.VMEM((1, TM), jnp.float32)],  # acc_cns
        compiler_params=pltpu.CompilerParams(
            dimension_semantics=("parallel", "arbitrary"),
            vmem_limit_bytes=32 * 1024 * 1024),
        cost_estimate=cost,
    )(slab)

    if avg_factor is None:
        # NOTE: default normalizes by total anchors (M); verify against the
        # training config's avg_factor convention (often num positive samples).
        avg_factor = float(M)
    inv = 1.0 / avg_factor

    return {
        f'loss_box{suffix}': jnp.sum(part_box) * (BOX_LOSS_WEIGHT * inv),
        f'loss_cns{suffix}': jnp.sum(part_cns) * (CNS_LOSS_WEIGHT * inv),
    }


def _reference(box, box_target, weight, avg_factor, quality):
    """Pure-JAX reference for correctness check."""
    box = box.astype(jnp.float32)
    box_target = box_target.astype(jnp.float32)
    if weight is None:
        weight = jnp.ones_like(box)
    l1 = jnp.abs(box - box_target) * weight.astype(jnp.float32)
    loss_box = jnp.sum(l1) / avg_factor * BOX_LOSS_WEIGHT
    cns = quality[..., CNS_2D].astype(jnp.float32)
    dc = box[..., :2] - box_target[..., :2]
    cns_t = jnp.exp(-jnp.sqrt(jnp.sum(dc * dc, axis=-1)))
    bce = (jnp.maximum(cns, 0.0) - cns * cns_t
           + jnp.log1p(jnp.exp(-jnp.abs(cns))))
    loss_cns = jnp.sum(bce) / avg_factor * CNS_LOSS_WEIGHT
    return loss_box, loss_cns


if __name__ == "__main__":
    key = jax.random.PRNGKey(0)

    # --- Test 1: small shapes, with weight (single tile, single core) ---
    k1, k2, k3, k4 = jax.random.split(key, 4)
    B, N, D = 2, 8, 4                    # (batch, num_anchors, box_dim=4 [x, y, w, h])
    box = jax.random.normal(k1, (B, N, D), jnp.float32)
    box_target = jax.random.normal(k2, (B, N, D), jnp.float32)
    weight = jax.random.uniform(k3, (B, N, D), jnp.float32)
    quality = jax.random.normal(k4, (B, N, 2), jnp.float32)   # [CNS, YNS] logits
    avg_factor = 10.0

    out = sparse_box2d_loss(box, box_target, weight=weight,
                            avg_factor=avg_factor, quality=quality)
    jax.block_until_ready(out)
    ref_box, ref_cns = _reference(box, box_target, weight, avg_factor, quality)
    assert jnp.allclose(out['loss_box'], ref_box, rtol=1e-5, atol=1e-5)
    assert jnp.allclose(out['loss_cns'], ref_cns, rtol=1e-5, atol=1e-5)

    # --- Test 2: multi-tile grid + 2-way core split (forced via small tm_max),
    #             ragged/clamped tail tiles, weight=None ---
    k5, k6, k7 = jax.random.split(jax.random.PRNGKey(1), 3)
    B2, N2 = 2, 1200                     # M = 2400 -> M_pad 2432, TM 512, 5 tiles, grid (2, 3)
    box2 = jax.random.normal(k5, (B2, N2, D), jnp.float32)
    tgt2 = jax.random.normal(k6, (B2, N2, D), jnp.float32)
    qual2 = jax.random.normal(k7, (B2, N2, 2), jnp.float32)
    avg2 = 123.0

    out2 = sparse_box2d_loss(box2, tgt2, weight=None,
                             avg_factor=avg2, quality=qual2, tm_max=512)
    jax.block_until_ready(out2)
    ref_box2, ref_cns2 = _reference(box2, tgt2, None, avg2, qual2)
    assert jnp.allclose(out2['loss_box'], ref_box2, rtol=1e-5, atol=1e-5)
    assert jnp.allclose(out2['loss_cns'], ref_cns2, rtol=1e-5, atol=1e-5)

    print("KERNEL_OK")
</pallas_src>

<mosaic_0001>
module attributes {stable_mosaic.version = 11 : i64} {
  func.func @_sparse_box2d_loss_kernel(%arg0: i32, %arg1: i32, %arg2: memref<13x128xf32, #tpu.memory_space<vmem>>, %arg3: memref<1x1xf32, #tpu.memory_space<smem>>, %arg4: memref<1x1xf32, #tpu.memory_space<smem>>, %arg5: memref<1x128xf32, #tpu.memory_space<vmem>>, %arg6: memref<1x128xf32, #tpu.memory_space<vmem>>) attributes {dimension_semantics = [#tpu.dimension_semantics<parallel>, #tpu.dimension_semantics<arbitrary>], iteration_bounds = array<i64: 1, 1>, scalar_prefetch = 0 : i64, scratch_operands = 2 : i64, tpu.core_type = #tpu.core_type<tc>, window_params = [{transform_indices = @transform_0, window_bounds = array<i64: 13, 128>}, {transform_indices = @transform_1, window_bounds = array<i64: 1, 1>}, {transform_indices = @transform_2, window_bounds = array<i64: 1, 1>}]} {
    %c0_i32 = arith.constant 0 : i32
    %0 = arith.cmpi eq, %arg1, %c0_i32 : i32
    %1 = arith.extui %0 : i1 to i32
    %c0_i32_0 = arith.constant 0 : i32
    %2 = arith.cmpi ne, %1, %c0_i32_0 : i32
    scf.if %2 {
      %cst_17 = arith.constant 0.000000e+00 : f32
      %57 = vector.broadcast %cst_17 : f32 to vector<1x128xf32>
      %c0_18 = arith.constant 0 : index
      %c0_19 = arith.constant 0 : index
      %58 = vector.load %arg5[%c0_18, %c0_19] : memref<1x128xf32, #tpu.memory_space<vmem>>, vector<1x128xf32>
      tpu.vector_store %arg5[%c0_18, %c0_19], %57 {strides = array<i32>} : memref<1x128xf32, #tpu.memory_space<vmem>>, vector<1x128xf32>,
      %cst_20 = arith.constant 0.000000e+00 : f32
      %59 = vector.broadcast %cst_20 : f32 to vector<1x128xf32>
      %c0_21 = arith.constant 0 : index
      %c0_22 = arith.constant 0 : index
      %60 = vector.load %arg6[%c0_21, %c0_22] : memref<1x128xf32, #tpu.memory_space<vmem>>, vector<1x128xf32>
      tpu.vector_store %arg6[%c0_21, %c0_22], %59 {strides = array<i32>} : memref<1x128xf32, #tpu.memory_space<vmem>>, vector<1x128xf32>,
    } else {
    }
    %c0 = arith.constant 0 : index
    %c0_1 = arith.constant 0 : index
    %3 = vector.load %arg2[%c0, %c0_1] : memref<13x128xf32, #tpu.memory_space<vmem>>, vector<13x128xf32>
    %4 = vector.extract_strided_slice %3 {offsets = [0, 0], sizes = [4, 128], strides = [1, 1]} : vector<13x128xf32> to vector<4x128xf32>
    %5 = vector.extract_strided_slice %3 {offsets = [4, 0], sizes = [4, 128], strides = [1, 1]} : vector<13x128xf32> to vector<4x128xf32>
    %c1_i32 = arith.constant 1 : i32
    %6 = arith.muli %arg0, %c1_i32 : i32
    %7 = arith.addi %6, %arg1 : i32
    %c128_i32 = arith.constant 128 : i32
    %8 = arith.muli %7, %c128_i32 : i32
    %9 = tpu.iota {dimensions = array<i32: 1>} : vector<1x128xi32>
    %10 = vector.broadcast %8 : i32 to vector<1x128xi32>
    %11 = arith.addi %10, %9 : vector<1x128xi32>
    %c16_i32 = arith.constant 16 : i32
    %12 = vector.broadcast %c16_i32 : i32 to vector<1x128xi32>
    %13 = arith.cmpi slt, %11, %12 : vector<1x128xi32>
    %14 = arith.subf %4, %5 : vector<4x128xf32>
    %15 = math.absf %14 : vector<4x128xf32>
    %16 = vector.extract_strided_slice %3 {offsets = [8, 0], sizes = [4, 128], strides = [1, 1]} : vector<13x128xf32> to vector<4x128xf32>
    %17 = arith.mulf %15, %16 : vector<4x128xf32>
    %18 = vector.extract_strided_slice %3 {offsets = [12, 0], sizes = [1, 128], strides = [1, 1]} : vector<13x128xf32> to vector<1x128xf32>
    %c0_2 = arith.constant 0 : index
    %c0_3 = arith.constant 0 : index
    %19 = vector.load %arg5[%c0_2, %c0_3] : memref<1x128xf32, #tpu.memory_space<vmem>>, vector<1x128xf32>
    %cst = arith.constant dense<0.000000e+00> : vector<128xf32>
    %20 = vector.multi_reduction <add>, %17, %cst [0] : vector<4x128xf32> to vector<128xf32>
    %21 = vector.shape_cast %20 : vector<128xf32> to vector<1x128xf32>
    %cst_4 = arith.constant 0.000000e+00 : f32
    %22 = vector.broadcast %cst_4 : f32 to vector<1x128xf32>
    %23 = arith.select %13, %21, %22 : vector<1x128xi1>, vector<1x128xf32>
    %24 = arith.addf %19, %23 : vector<1x128xf32>
    %c0_5 = arith.constant 0 : index
    %c0_6 = arith.constant 0 : index
    %25 = vector.load %arg5[%c0_5, %c0_6] : memref<1x128xf32, #tpu.memory_space<vmem>>, vector<1x128xf32>
    tpu.vector_store %arg5[%c0_5, %c0_6], %24 {strides = array<i32>} : memref<1x128xf32, #tpu.memory_space<vmem>>, vector<1x128xf32>,
    %26 = vector.extract_strided_slice %4 {offsets = [0, 0], sizes = [1, 128], strides = [1, 1]} : vector<4x128xf32> to vector<1x128xf32>
    %27 = vector.extract_strided_slice %5 {offsets = [0, 0], sizes = [1, 128], strides = [1, 1]} : vector<4x128xf32> to vector<1x128xf32>
    %28 = arith.subf %26, %27 : vector<1x128xf32>
    %29 = vector.extract_strided_slice %4 {offsets = [1, 0], sizes = [1, 128], strides = [1, 1]} : vector<4x128xf32> to vector<1x128xf32>
    %30 = vector.extract_strided_slice %5 {offsets = [1, 0], sizes = [1, 128], strides = [1, 1]} : vector<4x128xf32> to vector<1x128xf32>
    %31 = arith.subf %29, %30 : vector<1x128xf32>
    %32 = arith.mulf %28, %28 : vector<1x128xf32>
    %33 = arith.mulf %31, %31 : vector<1x128xf32>
    %34 = arith.addf %32, %33 : vector<1x128xf32>
    %35 = math.sqrt %34 : vector<1x128xf32>
    %cst_7 = arith.constant 0.000000e+00 : f32
    %36 = vector.broadcast %cst_7 : f32 to vector<1x128xf32>
    %37 = arith.subf %36, %35 : vector<1x128xf32>
    %38 = math.exp %37 : vector<1x128xf32>
    %cst_8 = arith.constant 0.000000e+00 : f32
    %39 = vector.broadcast %cst_8 : f32 to vector<1x128xf32>
    %40 = arith.maximumf %18, %39 : vector<1x128xf32>
    %41 = arith.mulf %18, %38 : vector<1x128xf32>
    %42 = arith.subf %40, %41 : vector<1x128xf32>
    %43 = math.absf %18 : vector<1x128xf32>
    %cst_9 = arith.constant 0.000000e+00 : f32
    %44 = vector.broadcast %cst_9 : f32 to vector<1x128xf32>
    %45 = arith.subf %44, %43 : vector<1x128xf32>
    %46 = math.exp %45 : vector<1x128xf32>
    %47 = math.log1p %46 : vector<1x128xf32>
    %48 = arith.addf %42, %47 : vector<1x128xf32>
    %c0_10 = arith.constant 0 : index
    %c0_11 = arith.constant 0 : index
    %49 = vector.load %arg6[%c0_10, %c0_11] : memref<1x128xf32, #tpu.memory_space<vmem>>, vector<1x128xf32>
    %cst_12 = arith.constant 0.000000e+00 : f32
    %50 = vector.broadcast %cst_12 : f32 to vector<1x128xf32>
    %51 = arith.select %13, %48, %50 : vector<1x128xi1>, vector<1x128xf32>
    %52 = arith.addf %49, %51 : vector<1x128xf32>
    %c0_13 = arith.constant 0 : index
    %c0_14 = arith.constant 0 : index
    %53 = vector.load %arg6[%c0_13, %c0_14] : memref<1x128xf32, #tpu.memory_space<vmem>>, vector<1x128xf32>
    tpu.vector_store %arg6[%c0_13, %c0_14], %52 {strides = array<i32>} : memref<1x128xf32, #tpu.memory_space<vmem>>, vector<1x128xf32>,
    %c0_i32_15 = arith.constant 0 : i32
    %54 = arith.cmpi eq, %arg1, %c0_i32_15 : i32
    %55 = arith.extui %54 : i1 to i32
    %c0_i32_16 = arith.constant 0 : i32
    %56 = arith.cmpi ne, %55, %c0_i32_16 : i32
    scf.if %56 {
      %c0_17 = arith.constant 0 : index
      %c0_18 = arith.constant 0 : index
      %57 = vector.load %arg5[%c0_17, %c0_18] : memref<1x128xf32, #tpu.memory_space<vmem>>, vector<1x128xf32>
      %58 = vector.shape_cast %57 : vector<1x128xf32> to vector<1x1x128xf32>
      %cst_19 = arith.constant dense<0.000000e+00> : vector<1xf32>
      %59 = vector.multi_reduction <add>, %58, %cst_19 [1, 2] : vector<1x1x128xf32> to vector<1xf32>
      %60 = vector.shape_cast %59 : vector<1xf32> to vector<1x1x1xf32>
      %61 = vector.extract %60[0, 0, 0] : f32 from vector<1x1x1xf32>
      %c0_20 = arith.constant 0 : index
      %c0_21 = arith.constant 0 : index
      %62 = memref.load %arg3[%c0_20, %c0_21] : memref<1x1xf32, #tpu.memory_space<smem>>
      memref.store %61, %arg3[%c0_20, %c0_21] : memref<1x1xf32, #tpu.memory_space<smem>>
      %c0_22 = arith.constant 0 : index
      %c0_23 = arith.constant 0 : index
      %63 = vector.load %arg6[%c0_22, %c0_23] : memref<1x128xf32, #tpu.memory_space<vmem>>, vector<1x128xf32>
      %64 = vector.shape_cast %63 : vector<1x128xf32> to vector<1x1x128xf32>
      %cst_24 = arith.constant dense<0.000000e+00> : vector<1xf32>
      %65 = vector.multi_reduction <add>, %64, %cst_24 [1, 2] : vector<1x1x128xf32> to vector<1xf32>
      %66 = vector.shape_cast %65 : vector<1xf32> to vector<1x1x1xf32>
      %67 = vector.extract %66[0, 0, 0] : f32 from vector<1x1x1xf32>
      %c0_25 = arith.constant 0 : index
      %c0_26 = arith.constant 0 : index
      %68 = memref.load %arg4[%c0_25, %c0_26] : memref<1x1xf32, #tpu.memory_space<smem>>
      memref.store %67, %arg4[%c0_25, %c0_26] : memref<1x1xf32, #tpu.memory_space<smem>>
    } else {
    }
    return
  }
  func.func @transform_0(%arg0: i32, %arg1: i32) -> (i32, i32) {
    %c1_i32 = arith.constant 1 : i32
    %0 = arith.muli %arg0, %c1_i32 : i32
    %1 = arith.addi %0, %arg1 : i32
    %c0_i32 = arith.constant 0 : i32
    %2 = arith.minsi %1, %c0_i32 : i32
    %c0_i32_0 = arith.constant 0 : i32
    %c0_i32_1 = arith.constant 0 : i32
    return %c0_i32_0, %2 : i32, i32
  }
  func.func @transform_1(%arg0: i32, %arg1: i32) -> (i32, i32) {
    %c0_i32 = arith.constant 0 : i32
    %c0_i32_0 = arith.constant 0 : i32
    return %arg0, %c0_i32 : i32, i32
  }
  func.func @transform_2(%arg0: i32, %arg1: i32) -> (i32, i32) {
    %c0_i32 = arith.constant 0 : i32
    %c0_i32_0 = arith.constant 0 : i32
    return %arg0, %c0_i32 : i32, i32
  }
}

</mosaic_0001>

<llo_original>
// kernel: tpu_custom_call.1
$region0: #{tpu_custom_call.1}
  #allocation0 [shape = 'u32[]', space=smem, size = 0x4, offset = 0x4, fixed_abs, tag = 'smem constant byte address 0x4 - core index']
  #allocation1 [shape = 'u32[144,128]{1,0:T(1,128)}', space=vmem, size = 0x12000, scoped, tag = 'internal scratch']
  #allocation2 [shape = 'f32[1,128]{1,0:T(1,128)}', space=vmem, size = 0x200, scoped, tag = 'scratch operand']
  #allocation3 [shape = 'f32[1,128]{1,0:T(1,128)}', space=vmem, size = 0x200, scoped, tag = 'scratch operand']
  %s0 = inlined_call_operand.hbm [shape: f32[13,128], index: 0, kind: input, shape index: {}]
  %s1 = inlined_call_operand.hbm [shape: f32[1,1], index: 1, kind: output, shape index: {0}]
  %s2 = inlined_call_operand.hbm [shape: f32[1,1], index: 2, kind: output, shape index: {1}]
  %3 = xla_tuple %s1, %s2
  %s4 = sld [smem:[#allocation0]]
  $region34: #{tpu_custom_call.1} parent=0
    _
  %s6 = ssub.s32 1, %s4
  %s7 = scalar_select 0, %s6, %s4
  $region1: #{tpu_custom_call.1} parent=0
    #allocation4 [shape = 'u8[8192]{0}', space=vmem, size = 0x2000, scoped, tag = 'input window, operand 0, single buffered']
    #allocation5 [shape = 's32[1]{0}', space=sflag, size = 0x4, scoped, tag = 'scoped memory for tpu_custom_call.1']
    #allocation6 [shape = 's32[1]{0}', space=sflag, size = 0x4, scoped, tag = 'scoped memory for tpu_custom_call.1']
    #allocation7 [shape = 'u8[512]{0}', space=smem, size = 0x200, scoped, tag = 'output window, operand 0, single buffered']
    #allocation8 [shape = 'u8[512]{0}', space=smem, size = 0x200, scoped, tag = 'output window, operand 1, single buffered']
    #allocation9 [shape = 's32[1]{0}', space=sflag, size = 0x4, scoped, tag = 'scoped memory for tpu_custom_call.1']
    %8 = vsyncpa [#allocation5], 0
    %9 = vsyncpa [#allocation6], 0
    %10 = vsyncpa [#allocation9], 0
    // Predicated region
    $region2: #{tpu_custom_call.1} parent=1 // pred_check
      _
    $region3: #{tpu_custom_call.1} parent=1 // pred_check_branch
      %12 = sbr.rel (0) target = $region5
    $region4: #{tpu_custom_call.1} parent=1 // pred_region
      %s13 = sadd.s32 0, 0
      %p14 = scmp.lt.s32.totalorder %s13, 0
      %s15 = scalar_select %p14, %s13, 0
      %s17 = ssub.s32 256, 256
      %18 = vsyncadd [#allocation5], %s17
      %s19 = smul.addr %s15, 128
      %s20 = scalar_lea.hbm %s0, %s19
      %s21 = sshll.u32 [#allocation4], 4
      %s22 = int_to_ptr.vmem [resolvable:$true] %s21
      %27 = dma.hbm_to_vmem [thread:$0]  %s20, 256, %s22, [#allocation5], 128, 128, 8
    $region5: #{tpu_custom_call.1} parent=1 // pred_fallthru
      _
    // Predicated region
    $region6: #{tpu_custom_call.1} parent=1 // pred_check
      _
    $region7: #{tpu_custom_call.1} parent=1 // pred_check_branch
      %29 = sbr.rel (0) target = $region9
    $region8: #{tpu_custom_call.1} parent=1 // pred_region
      %30 = dma.done [#allocation5], 256
    $region9: #{tpu_custom_call.1} parent=1 // pred_fallthru
      _
    %s31 = sadd.s32 0, 0
    %p32 = scmp.lt.s32.totalorder %s31, 0
    %s33 = scalar_select %p32, %s31, 0
    %p34 = scmp.eq.s32.totalorder 0, 0
    // Predicated region
    $region10: #{tpu_custom_call.1} parent=1 // pred_check
      %p35 = pneg %p34
    $region11: #{tpu_custom_call.1} parent=1 // pred_check_branch
      %37 = sbr.rel (%p35) target = $region13
    $region12: #{tpu_custom_call.1} parent=1 // pred_region
      %38 = vst [vmem:[#allocation2] sm:$0x1] 0.0
      %39 = vst [vmem:[#allocation3] sm:$0x1] 0.0
    $region13: #{tpu_custom_call.1} parent=1 // pred_fallthru
      _
    %v40 = vld [vmem:[#allocation4] sm:$0xff]
    %v41 = vld [vmem:[#allocation4 + $0x8] sm:$0x1f]
    %s42 = sadd.s32 0, 0
    %s43 = smul.u32 %s42, 128
    %v44 = vlaneseq
    %v45 = vand.u32 %v44, 127
    %v46 = vstv %s43
    %v47 = vadd.s32 %v46, %v45
    %vm48 = vcmp.lt.s32.totalorder %v47, 16
    %v50 = vrot.slane %v40, 4
    %v52 = vsub.f32 %v40, %v50
    %v53 = vand.u32 2147483647, %v52
    %v54 = vmul.f32 %v53, %v41
    %v55 = vld [vmem:[#allocation2] sm:$0x1]
    %vm56 = vcmask 1043456
    %v57 = vsel %vm56, %v54, 0.0
    %v58 = vrot.slane %v57, 4
    %v59 = vadd.f32 %v57, %v58
    %v60 = vrot.slane %v59, 2
    %v61 = vadd.f32 %v59, %v60
    %v62 = vrot.slane %v61, 1
    %v63 = vadd.f32 %v61, %v62
    %v64 = vsel %vm48, %v63, 0.0
    %v65 = vadd.f32 %v55, %v64
    %66 = vst [vmem:[#allocation2] sm:$0x1] %v65
    %v67 = vmul.f32 %v52, %v52
    %v69 = vrot.slane %v67, 1
    %v71 = vadd.f32 %v67, %v69
    %v72 = vrsqrt.pop %v71
    %v73 = vmul.f32 %v71, %v72
    %vm74 = vcmp.eq.f32.partialorder %v71, inf
    %v75 = vsel %vm74, %v71, %v73
    %vm76 = vcmp.eq.f32.partialorder %v71, 0.0
    %v77 = vand.u32 %v71, 2147483648
    %v78 = vsel %vm76, %v77, %v75
    %v79 = vsub.f32 0.0, %v78
    %v80 = vmul.f32 %v79, 1.442695
    %v81 = vpow.pop %v80
    %v82 = vmax.f32 %v41, 0.0
    %v84 = vrot.slane %v81, 4
    %v86 = vmul.f32 %v41, %v84
    %v87 = vsub.f32 %v82, %v86
    %v88 = vand.u32 2147483647, %v41
    %v89 = vsub.f32 0.0, %v88
    %v90 = vmul.f32 %v89, 1.442695
    %v91 = vpow.pop %v90
    %v92 = vadd.f32 %v91, 1.0
    %v93 = vlog2.pop %v92
    %v94 = vmul.f32 %v93, 0.6931472
    %v95 = vmul.f32 -0.5, %v91
    %v96 = vadd.f32 %v95, 1.0
    %v97 = vmul.f32 %v96, %v91
    %v98 = vand.u32 2147483647, %v91
    %vm99 = vcmp.lt.f32.partialorder %v98, 0.0004427343
    %v100 = vsel %vm99, %v97, %v94
    %v101 = vadd.f32 %v87, %v100
    %v102 = vld [vmem:[#allocation3] sm:$0x1]
    %v103 = vsel %vm48, %v101, 0.0
    %v105 = vcombine.high %v103, %v103
    %v107 = vunpack.c.l.s4 1966171168
    %v108 = vunpack.c.0.s8 %v107
    %v109 = vlaneseq
    %v110 = vshrl.u32 %v109, 7
    %v111 = vsub.s32 %v108, %v110
    %v112 = vrot.slane %v105, %v111
    %v114 = vunpack.c.l.s4 1966171168
    %v115 = vunpack.c.0.s8 %v114
    %v116 = vlaneseq
    %v117 = vshrl.u32 %v116, 7
    %v118 = vsub.s32 %v115, %v117
    %v119 = vrot.slane %v112, %v118
    %v121 = vadd.f32 %v102, %v119
    %122 = vst [vmem:[#allocation3] sm:$0x1] %v121
    // Predicated region
    $region14: #{tpu_custom_call.1} parent=1 // pred_check
      %p123 = pneg %p34
    $region15: #{tpu_custom_call.1} parent=1 // pred_check_branch
      %125 = sbr.rel (%p123) target = $region17
    $region16: #{tpu_custom_call.1} parent=1 // pred_region
      %v126 = vld [vmem:[#allocation2] sm:$0x1]
      %vm127 = vcmask 1040384
      %v128 = vsel %vm127, %v126, 0.0
      %129 = vadd.xlane.f32.xlu0 %v128
      %v130 = vpop.xlane.xlu0 %129
      %v131 = vrot.slane %v130, 4
      %v132 = vadd.f32 %v130, %v131
      %v133 = vrot.slane %v132, 2
      %v134 = vadd.f32 %v132, %v133
      %v135 = vrot.slane %v134, 1
      %v136 = vadd.f32 %v134, %v135
      %s137 = vtos %v136
      %s138 = scalar_lea.smem [#allocation7], 0
      %139 = sst [smem:[%s138]] %s137
      %v140 = vld [vmem:[#allocation3] sm:$0x1]
      %v141 = vsel %vm127, %v140, 0.0
      %142 = vadd.xlane.f32.xlu0 %v141
      %v143 = vpop.xlane.xlu0 %142
      %v144 = vrot.slane %v143, 4
      %v145 = vadd.f32 %v143, %v144
      %v146 = vrot.slane %v145, 2
      %v147 = vadd.f32 %v145, %v146
      %v148 = vrot.slane %v147, 1
      %v149 = vadd.f32 %v147, %v148
      %s150 = vtos %v149
      %s151 = scalar_lea.smem [#allocation8], 0
      %152 = sst [smem:[%s151]] %s150
    $region17: #{tpu_custom_call.1} parent=1 // pred_fallthru
      _
    // Predicated region
    $region18: #{tpu_custom_call.1} parent=1 // pred_check
      _
    $region19: #{tpu_custom_call.1} parent=1 // pred_check_branch
      %154 = sbr.rel (0) target = $region21
    $region20: #{tpu_custom_call.1} parent=1 // pred_region
      %s156 = ssub.s32 16, 16
      %157 = vsyncadd [#allocation6], %s156
      %160 = dma.smem_to_hbm [#allocation7], 16, %s1, [#allocation6]
    $region21: #{tpu_custom_call.1} parent=1 // pred_fallthru
      _
    // Predicated region
    $region22: #{tpu_custom_call.1} parent=1 // pred_check
      _
    $region23: #{tpu_custom_call.1} parent=1 // pred_check_branch
      %162 = sbr.rel (0) target = $region25
    $region24: #{tpu_custom_call.1} parent=1 // pred_region
      %s164 = ssub.s32 16, 16
      %165 = vsyncadd [#allocation9], %s164
      %168 = dma.smem_to_hbm [#allocation8], 16, %s2, [#allocation9]
    $region25: #{tpu_custom_call.1} parent=1 // pred_fallthru
      _
    // Predicated region
    $region26: #{tpu_custom_call.1} parent=1 // pred_check
      _
    $region27: #{tpu_custom_call.1} parent=1 // pred_check_branch
      %170 = sbr.rel (0) target = $region29
    $region28: #{tpu_custom_call.1} parent=1 // pred_region
      %171 = dma.done [#allocation6], 16
    $region29: #{tpu_custom_call.1} parent=1 // pred_fallthru
      _
    // Predicated region
    $region30: #{tpu_custom_call.1} parent=1 // pred_check
      _
    $region31: #{tpu_custom_call.1} parent=1 // pred_check_branch
      %173 = sbr.rel (0) target = $region33
    $region32: #{tpu_custom_call.1} parent=1 // pred_region
      %174 = dma.done [#allocation9], 16
    $region33: #{tpu_custom_call.1} parent=1 // pred_fallthru
      _
    %175 = sfence
    %176 = vsyncpa [#allocation5], 1
    %177 = vsyncpa [#allocation6], 1
    %178 = vsyncpa [#allocation9], 1

</llo_original>
